<compile_context>
chip_gen: v7x
topology: tpu7x:2x2x1
jax: 0.10.0
libtpu: 0.0.40
codegen_flags: <defaults>
</compile_context>

<pallas_src>
from functools import partial

import jax
import jax.numpy as jnp
from jax.experimental import pallas as pl
from jax.experimental.pallas import tpu as pltpu


# ----------------------------- kernels -----------------------------

def _fwa_add_kernel(noise_t_ref, w_ref, b_ref, x_ref, o_ref):
    """out = x + noise, noise = Linear(noise_embed) broadcast over spatial.

    noise_t_ref: (in_ch, B)   transposed noise embedding
    w_ref:       (C, in_ch)   Linear weight
    b_ref:       (C, 1)       Linear bias (column)
    x_ref/o_ref: (B, C, Nt)
    """
    B = x_ref.shape[0]
    # (C, in_ch) @ (in_ch, B) -> (C, B): per-(channel, batch) additive noise.
    noise_t = jnp.dot(w_ref[...], noise_t_ref[...],
                      precision="highest",
                      preferred_element_type=jnp.float32) + b_ref[...]
    for b in range(B):                        # static unroll over the (small) batch block
        o_ref[b] = x_ref[b] + noise_t[:, b:b + 1]          # (C,1) broadcasts along lanes


def _fwa_affine_kernel(noise_t_ref, wg_ref, bg_ref, wb_ref, bb_ref, x_ref, o_ref):
    """out = (1 + gamma) * x + beta, with [gamma; beta] = Linear(noise_embed)."""
    B = x_ref.shape[0]
    noise_t = noise_t_ref[...]                               # (in_ch, B)
    gamma_t = jnp.dot(wg_ref[...], noise_t, precision="highest",
                      preferred_element_type=jnp.float32) + bg_ref[...]   # (C, B)
    beta_t = jnp.dot(wb_ref[...], noise_t, precision="highest",
                     preferred_element_type=jnp.float32) + bb_ref[...]    # (C, B)
    for b in range(B):
        g = gamma_t[:, b:b + 1]                              # (C, 1)
        bt = beta_t[:, b:b + 1]                              # (C, 1)
        o_ref[b] = (1.0 + g) * x_ref[b] + bt


# ----------------------------- wrapper -----------------------------

def _pick_block_n(N, B, C, budget_bytes=4 << 20):
    """Largest multiple-of-128 spatial tile that divides N and keeps the x block <= budget."""
    if N % 128 != 0:
        return N                                   # must use the full dim if not 128-aligned
    max_elems = max(budget_bytes // (4 * B * C), 128)
    nt = min(N, (max_elems // 128) * 128)
    while N % nt != 0:
        nt -= 128
    return nt


def _const_spec(shape):
    zeros = (0,) * len(shape)
    return pl.BlockSpec(shape, lambda j, _z=zeros: _z)


def feature_wise_affine(x, noise_embed, params, *, use_affine_level=False, block_n=None):
    """x: (B, C, H, W) float32 (NCHW);  noise_embed: (B, in_channels)."""
    B, C, H, W = x.shape
    N = H * W
    x3 = x.reshape(B, C, N).astype(jnp.float32)

    w = params["weight"].astype(jnp.float32)        # (C*(1+affine), in_ch)
    bias = params["bias"].astype(jnp.float32)       # (C*(1+affine),)
    noise_t = noise_embed.astype(jnp.float32).T     # (in_ch, B) — tiny host-side transpose
    in_ch = noise_t.shape[0]

    nt = block_n if block_n is not None else _pick_block_n(N, B, C)
    assert N % nt == 0, "spatial tile must divide H*W"
    grid = (N // nt,)

    x_spec = pl.BlockSpec((B, C, nt), lambda j: (0, 0, j))

    if use_affine_level:
        wg, wb = w[:C], w[C:]
        bg, bb = bias[:C].reshape(C, 1), bias[C:].reshape(C, 1)
        kernel = _fwa_affine_kernel
        in_specs = [_const_spec((in_ch, B)),
                    _const_spec((C, in_ch)), _const_spec((C, 1)),
                    _const_spec((C, in_ch)), _const_spec((C, 1)),
                    x_spec]
        args = (noise_t, wg, bg, wb, bb, x3)
    else:
        bcol = bias.reshape(C, 1)
        kernel = _fwa_add_kernel
        in_specs = [_const_spec((in_ch, B)),
                    _const_spec((C, in_ch)), _const_spec((C, 1)),
                    x_spec]
        args = (noise_t, w, bcol, x3)

    out = pl.pallas_call(
        kernel,
        out_shape=jax.ShapeDtypeStruct((B, C, N), jnp.float32),
        grid_spec=pltpu.PrefetchScalarGridSpec(
            num_scalar_prefetch=0,
            grid=grid,
            in_specs=in_specs,
            out_specs=x_spec,
        ),
        compiler_params=pltpu.CompilerParams(dimension_semantics=("parallel",)),
    )(*args)
    return out.reshape(B, C, H, W)


# ----------------------------- reference -----------------------------

def feature_wise_affine_ref(x, noise_embed, params, *, use_affine_level=False):
    """Pure-JAX reference matching the PyTorch forward exactly."""
    B, C = x.shape[0], x.shape[1]
    noise = jnp.dot(noise_embed, params["weight"].T, precision="highest") + params["bias"]
    if use_affine_level:
        gamma = noise[:, :C].reshape(B, C, 1, 1)
        beta = noise[:, C:].reshape(B, C, 1, 1)
        return (1.0 + gamma) * x + beta
    return x + noise.reshape(B, C, 1, 1)


# ----------------------------- demo / test -----------------------------

if __name__ == "__main__":
    B, IN_CH, C, H, W = 2, 32, 8, 16, 16

    key = jax.random.PRNGKey(0)
    k1, k2, k3, k4, k5, k6 = jax.random.split(key, 6)

    x = jax.random.normal(k1, (B, C, H, W), jnp.float32)
    noise_embed = jax.random.normal(k2, (B, IN_CH), jnp.float32)

    # --- default path: use_affine_level=False (out = x + noise) ---
    params_add = {
        "weight": 0.2 * jax.random.normal(k3, (C, IN_CH), jnp.float32),
        "bias": 0.1 * jax.random.normal(k4, (C,), jnp.float32),
    }
    out = jax.block_until_ready(
        feature_wise_affine(x, noise_embed, params_add, use_affine_level=False))
    ref = feature_wise_affine_ref(x, noise_embed, params_add, use_affine_level=False)
    assert out.shape == (B, C, H, W)
    assert jnp.allclose(out, ref, atol=1e-4, rtol=1e-4), (
        f"add path max abs err {jnp.max(jnp.abs(out - ref))}")

    # --- affine path: use_affine_level=True (out = (1+gamma)*x + beta) ---
    # block_n=128 also exercises a multi-step spatial grid (N=256 -> 2 tiles).
    params_aff = {
        "weight": 0.2 * jax.random.normal(k5, (2 * C, IN_CH), jnp.float32),
        "bias": 0.1 * jax.random.normal(k6, (2 * C,), jnp.float32),
    }
    out2 = jax.block_until_ready(
        feature_wise_affine(x, noise_embed, params_aff, use_affine_level=True, block_n=128))
    ref2 = feature_wise_affine_ref(x, noise_embed, params_aff, use_affine_level=True)
    assert jnp.allclose(out2, ref2, atol=1e-4, rtol=1e-4), (
        f"affine path max abs err {jnp.max(jnp.abs(out2 - ref2))}")

    print("KERNEL_OK")
</pallas_src>

<mosaic_0001>
module attributes {stable_mosaic.version = 11 : i64} {
  func.func @_fwa_add_kernel(%arg0: i32, %arg1: memref<32x2xf32, #tpu.memory_space<vmem>>, %arg2: memref<8x32xf32, #tpu.memory_space<vmem>>, %arg3: memref<8x1xf32, #tpu.memory_space<vmem>>, %arg4: memref<2x8x256xf32, #tpu.memory_space<vmem>>, %arg5: memref<2x8x256xf32, #tpu.memory_space<vmem>>) attributes {dimension_semantics = [#tpu.dimension_semantics<parallel>], iteration_bounds = array<i64: 1>, scalar_prefetch = 0 : i64, scratch_operands = 0 : i64, tpu.core_type = #tpu.core_type<tc>, window_params = [{pipeline_mode = #tpu.pipeline_mode<synchronous>, transform_indices = @transform_0, window_bounds = array<i64: 32, 2>}, {pipeline_mode = #tpu.pipeline_mode<synchronous>, transform_indices = @transform_1, window_bounds = array<i64: 8, 32>}, {pipeline_mode = #tpu.pipeline_mode<synchronous>, transform_indices = @transform_2, window_bounds = array<i64: 8, 1>}, {transform_indices = @transform_3, window_bounds = array<i64: 2, 8, 256>}, {transform_indices = @transform_4, window_bounds = array<i64: 2, 8, 256>}]} {
    %c0 = arith.constant 0 : index
    %c0_0 = arith.constant 0 : index
    %0 = vector.load %arg2[%c0, %c0_0] : memref<8x32xf32, #tpu.memory_space<vmem>>, vector<8x32xf32>
    %c0_1 = arith.constant 0 : index
    %c0_2 = arith.constant 0 : index
    %1 = vector.load %arg1[%c0_1, %c0_2] : memref<32x2xf32, #tpu.memory_space<vmem>>, vector<32x2xf32>
    %cst = arith.constant dense<0.000000e+00> : vector<8x2xf32>
    %2 = tpu.matmul %0, %1, %cst {dimension_numbers = #tpu.dot_dimension_numbers<[1], [0], [0], [1], [0, 0, 1, 1], [], []>, precision = #tpu.contract_precision<fp32>} : vector<8x32xf32>, vector<32x2xf32>, vector<8x2xf32> -> vector<8x2xf32>
    %c0_3 = arith.constant 0 : index
    %c0_4 = arith.constant 0 : index
    %3 = vector.load %arg3[%c0_3, %c0_4] : memref<8x1xf32, #tpu.memory_space<vmem>>, vector<8x1xf32>
    %4 = vector.broadcast %3 : vector<8x1xf32> to vector<8x2xf32>
    %5 = arith.addf %2, %4 : vector<8x2xf32>
    %c0_5 = arith.constant 0 : index
    %c0_6 = arith.constant 0 : index
    %c0_7 = arith.constant 0 : index
    %6 = vector.load %arg4[%c0_5, %c0_6, %c0_7] : memref<2x8x256xf32, #tpu.memory_space<vmem>>, vector<1x8x256xf32>
    %7 = vector.shape_cast %6 : vector<1x8x256xf32> to vector<8x256xf32>
    %8 = vector.extract_strided_slice %5 {offsets = [0, 0], sizes = [8, 1], strides = [1, 1]} : vector<8x2xf32> to vector<8x1xf32>
    %9 = vector.broadcast %8 : vector<8x1xf32> to vector<8x256xf32>
    %10 = arith.addf %7, %9 : vector<8x256xf32>
    %c0_8 = arith.constant 0 : index
    %c0_9 = arith.constant 0 : index
    %c0_10 = arith.constant 0 : index
    %11 = vector.load %arg5[%c0_8, %c0_9, %c0_10] : memref<2x8x256xf32, #tpu.memory_space<vmem>>, vector<1x8x256xf32>
    %12 = vector.shape_cast %11 : vector<1x8x256xf32> to vector<8x256xf32>
    %13 = vector.shape_cast %10 : vector<8x256xf32> to vector<1x8x256xf32>
    tpu.vector_store %arg5[%c0_8, %c0_9, %c0_10], %13 {strides = array<i32>} : memref<2x8x256xf32, #tpu.memory_space<vmem>>, vector<1x8x256xf32>,
    %c1 = arith.constant 1 : index
    %c0_11 = arith.constant 0 : index
    %c0_12 = arith.constant 0 : index
    %14 = vector.load %arg4[%c1, %c0_11, %c0_12] : memref<2x8x256xf32, #tpu.memory_space<vmem>>, vector<1x8x256xf32>
    %15 = vector.shape_cast %14 : vector<1x8x256xf32> to vector<8x256xf32>
    %16 = vector.extract_strided_slice %5 {offsets = [0, 1], sizes = [8, 1], strides = [1, 1]} : vector<8x2xf32> to vector<8x1xf32>
    %17 = vector.broadcast %16 : vector<8x1xf32> to vector<8x256xf32>
    %18 = arith.addf %15, %17 : vector<8x256xf32>
    %c1_13 = arith.constant 1 : index
    %c0_14 = arith.constant 0 : index
    %c0_15 = arith.constant 0 : index
    %19 = vector.load %arg5[%c1_13, %c0_14, %c0_15] : memref<2x8x256xf32, #tpu.memory_space<vmem>>, vector<1x8x256xf32>
    %20 = vector.shape_cast %19 : vector<1x8x256xf32> to vector<8x256xf32>
    %21 = vector.shape_cast %18 : vector<8x256xf32> to vector<1x8x256xf32>
    tpu.vector_store %arg5[%c1_13, %c0_14, %c0_15], %21 {strides = array<i32>} : memref<2x8x256xf32, #tpu.memory_space<vmem>>, vector<1x8x256xf32>,
    return
  }
  func.func @transform_0(%arg0: i32) -> (i32, i32) {
    %c0_i32 = arith.constant 0 : i32
    %c0_i32_0 = arith.constant 0 : i32
    %c0_i32_1 = arith.constant 0 : i32
    return %c0_i32, %c0_i32_0 : i32, i32
  }
  func.func @transform_1(%arg0: i32) -> (i32, i32) {
    %c0_i32 = arith.constant 0 : i32
    %c0_i32_0 = arith.constant 0 : i32
    %c0_i32_1 = arith.constant 0 : i32
    return %c0_i32, %c0_i32_0 : i32, i32
  }
  func.func @transform_2(%arg0: i32) -> (i32, i32) {
    %c0_i32 = arith.constant 0 : i32
    %c0_i32_0 = arith.constant 0 : i32
    %c0_i32_1 = arith.constant 0 : i32
    return %c0_i32, %c0_i32_0 : i32, i32
  }
  func.func @transform_3(%arg0: i32) -> (i32, i32, i32) {
    %c0_i32 = arith.constant 0 : i32
    %c0_i32_0 = arith.constant 0 : i32
    %c0_i32_1 = arith.constant 0 : i32
    return %c0_i32, %c0_i32_0, %arg0 : i32, i32, i32
  }
  func.func @transform_4(%arg0: i32) -> (i32, i32, i32) {
    %c0_i32 = arith.constant 0 : i32
    %c0_i32_0 = arith.constant 0 : i32
    %c0_i32_1 = arith.constant 0 : i32
    return %c0_i32, %c0_i32_0, %arg0 : i32, i32, i32
  }
}

</mosaic_0001>

<llo_original>
// kernel: tpu_custom_call.1
$region0: #{tpu_custom_call.1}
  #allocation0 [shape = 'u32[]', space=smem, size = 0x4, offset = 0x4, fixed_abs, tag = 'smem constant byte address 0x4 - core index']
  #allocation1 [shape = 'u32[144,128]{1,0:T(1,128)}', space=vmem, size = 0x12000, scoped, tag = 'internal scratch']
  %s0 = inlined_call_operand.vmem [shape: f32[32,2], index: 0, kind: input, shape index: {}]
  %s1 = inlined_call_operand.vmem [shape: f32[8,32], index: 1, kind: input, shape index: {}]
  %s2 = inlined_call_operand.vmem [shape: f32[8,1], index: 2, kind: input, shape index: {}]
  %s3 = inlined_call_operand.vmem [shape: f32[2,8,256], index: 3, kind: input, shape index: {}]
  %s4 = inlined_call_operand.hbm [shape: f32[2,8,256], index: 4, kind: output, shape index: {}]
  %s5 = sld [smem:[#allocation0]]
  $region26: #{tpu_custom_call.1} parent=0
    _
  %s7 = ssub.s32 1, %s5
  %s8 = scalar_select 0, %s7, %s5
  $region1: #{tpu_custom_call.1} parent=0
    #allocation2 [shape = 'u8[16384]{0}', space=vmem, size = 0x4000, scoped, tag = 'output window, operand 0, single buffered']
    #allocation3 [shape = 's32[1]{0}', space=sflag, size = 0x4, scoped, tag = 'scoped memory for tpu_custom_call.1']
    %9 = vsyncpa [#allocation3], 0
    // Predicated region
    $region2: #{tpu_custom_call.1} parent=1 // pred_check
      _
    $region3: #{tpu_custom_call.1} parent=1 // pred_check_branch
      %11 = sbr.rel (0) target = $region5
    $region4: #{tpu_custom_call.1} parent=1 // pred_region
      _
    $region5: #{tpu_custom_call.1} parent=1 // pred_fallthru
      _
    // Predicated region
    $region6: #{tpu_custom_call.1} parent=1 // pred_check
      _
    $region7: #{tpu_custom_call.1} parent=1 // pred_check_branch
      %13 = sbr.rel (0) target = $region9
    $region8: #{tpu_custom_call.1} parent=1 // pred_region
      _
    $region9: #{tpu_custom_call.1} parent=1 // pred_fallthru
      _
    // Predicated region
    $region10: #{tpu_custom_call.1} parent=1 // pred_check
      _
    $region11: #{tpu_custom_call.1} parent=1 // pred_check_branch
      %15 = sbr.rel (0) target = $region13
    $region12: #{tpu_custom_call.1} parent=1 // pred_region
      _
    $region13: #{tpu_custom_call.1} parent=1 // pred_fallthru
      _
    // Predicated region
    $region14: #{tpu_custom_call.1} parent=1 // pred_check
      _
    $region15: #{tpu_custom_call.1} parent=1 // pred_check_branch
      %17 = sbr.rel (0) target = $region17
    $region16: #{tpu_custom_call.1} parent=1 // pred_region
      _
    $region17: #{tpu_custom_call.1} parent=1 // pred_fallthru
      _
    %v18 = vld [vmem:[%s1] sm:$0xff]
    %v19 = vld [vmem:[%s0] sm:$0xff]
    %v20 = vld [vmem:[%s0 + $0x8] sm:$0xff]
    %v21 = vld [vmem:[%s0 + $0x10] sm:$0xff]
    %v22 = vld [vmem:[%s0 + $0x18] sm:$0xff]
    %v23 = vld [vmem:[%s2] sm:$0xff]
    %25 = vset.pattern.permute.xlu0 0
    %26 = vperm.xlu0 %25, %v23
    %v27 = vpop.permute.xlu0 %26
    %vm29 = vcmask 261120
    %v31 = vsel %vm29, %v18, 0
    %33 = vmatprep.subr.mxu0 0.0
    %v34 = vand.u32 %v19, 4294901760
    %35 = vmatpush1.msra.mxu0 %v34
    %36 = vmatprep.subr.mxu0 0.0
    %v37 = vand.u32 %v20, 4294901760
    %38 = vmatpush1.msra.mxu0 %v37
    %39 = vmatprep.subr.mxu0 0.0
    %v40 = vand.u32 %v21, 4294901760
    %41 = vmatpush1.msra.mxu0 %v40
    %42 = vmatprep.subr.mxu0 0.0
    %v43 = vand.u32 %v22, 4294901760
    %44 = vmatpush1.msra.mxu0 %v43
    %45 = vmatprep.subr.mxu0 0.0
    %46 = vmatpush1.msra.mxu0 0.0
    %47 = vmatprep.subr.mxu0 0.0
    %48 = vmatpush1.msra.mxu0 0.0
    %49 = vmatprep.subr.mxu0 0.0
    %50 = vmatpush1.msra.mxu0 0.0
    %51 = vmatprep.subr.mxu0 0.0
    %52 = vmatpush1.msra.mxu0 0.0
    %53 = vmatprep.subr.mxu0 0.0
    %54 = vmatpush1.msra.mxu0 0.0
    %55 = vmatprep.subr.mxu0 0.0
    %56 = vmatpush1.msra.mxu0 0.0
    %57 = vmatprep.subr.mxu0 0.0
    %58 = vmatpush1.msra.mxu0 0.0
    %59 = vmatprep.subr.mxu0 0.0
    %60 = vmatpush1.msra.mxu0 0.0
    %61 = vmatprep.subr.mxu0 0.0
    %62 = vmatpush1.msra.mxu0 0.0
    %63 = vmatprep.subr.mxu0 0.0
    %64 = vmatpush1.msra.mxu0 0.0
    %65 = vmatprep.subr.mxu0 0.0
    %66 = vmatpush1.msra.mxu0 0.0
    %67 = vmatprep.subr.mxu0 0.0
    %68 = vmatpush1.msra.mxu0 0.0
    %69 = vmatprep.subr.mxu0 0.0
    %70 = vmatpush1.msra.mxu0 0.0
    %71 = vmatprep.subr.mxu0 0.0
    %72 = vmatpush1.msra.mxu0 0.0
    %73 = vmatprep.subr.mxu0 0.0
    %74 = vmatpush1.msra.mxu0 0.0
    %75 = vmatprep.subr.mxu0 0.0
    %76 = vmatpush1.msra.mxu0 0.0
    %77 = vmatprep.subr.mxu0 0.0
    %78 = vmatpush1.msra.mxu0 0.0
    %79 = vmatprep.subr.mxu0 0.0
    %80 = vmatpush1.msra.mxu0 0.0
    %81 = vmatprep.subr.mxu0 0.0
    %82 = vmatpush1.msra.mxu0 0.0
    %83 = vmatprep.subr.mxu0 0.0
    %84 = vmatpush1.msra.mxu0 0.0
    %85 = vmatprep.subr.mxu0 0.0
    %86 = vmatpush1.msra.mxu0 0.0
    %87 = vmatprep.subr.mxu0 0.0
    %88 = vmatpush1.msra.mxu0 0.0
    %89 = vmatprep.subr.mxu0 0.0
    %90 = vmatpush1.msra.mxu0 0.0
    %91 = vmatprep.subr.mxu0 0.0
    %92 = vmatpush1.msra.mxu0 0.0
    %93 = vmatprep.subr.mxu0 0.0
    %94 = vmatpush1.msra.mxu0 0.0
    %95 = vmatprep.subr.mxu0 0.0
    %96 = vmatpush1.msra.mxu0 0.0
    %97 = vmatprep.subr.mxu0 0.0
    %98 = vmatpush1.msra.mxu0 0.0
    %99 = vmatprep.subr.mxu0 0.0
    %100 = vmatpush1.msra.mxu0 0.0
    %101 = vmatprep.mubr.f32.mxu0 0.0
    %v102 = vand.u32 %v31, 4294901760
    %v103 = vsub.f32 %v31, %v102
    %v104 = vand.u32 %v103, 4294901760
    %v105 = vsub.f32 %v103, %v104
    %v106 = vand.u32 %v105, 4294901760
    %107 = vmatmul.mubr.f32.gmra.mrb[0].mxu0 %v106
    %v108 = vpop.f32.mrb[0].mxu0
    %v109 = vadd.f32 %v27, %v108
    %v110 = vpop.f32.mrb[0].mxu0
    %111 = vdwg.mxu0
    %112 = vmatprep.subr.mxu0 0.0
    %v113 = vand.u32 %v19, 4294901760
    %v114 = vsub.f32 %v19, %v113
    %v115 = vand.u32 %v114, 4294901760
    %v116 = vsub.f32 %v114, %v115
    %v117 = vand.u32 %v116, 4294901760
    %118 = vmatpush1.msra.mxu0 %v117
    %119 = vmatprep.subr.mxu0 0.0
    %v120 = vand.u32 %v20, 4294901760
    %v121 = vsub.f32 %v20, %v120
    %v122 = vand.u32 %v121, 4294901760
    %v123 = vsub.f32 %v121, %v122
    %v124 = vand.u32 %v123, 4294901760
    %125 = vmatpush1.msra.mxu0 %v124
    %126 = vmatprep.subr.mxu0 0.0
    %v127 = vand.u32 %v21, 4294901760
    %v128 = vsub.f32 %v21, %v127
    %v129 = vand.u32 %v128, 4294901760
    %v130 = vsub.f32 %v128, %v129
    %v131 = vand.u32 %v130, 4294901760
    %132 = vmatpush1.msra.mxu0 %v131
    %133 = vmatprep.subr.mxu0 0.0
    %v134 = vand.u32 %v22, 4294901760
    %v135 = vsub.f32 %v22, %v134
    %v136 = vand.u32 %v135, 4294901760
    %v137 = vsub.f32 %v135, %v136
    %v138 = vand.u32 %v137, 4294901760
    %139 = vmatpush1.msra.mxu0 %v138
    %140 = vmatprep.subr.mxu0 0.0
    %141 = vmatpush1.msra.mxu0 0.0
    %142 = vmatprep.subr.mxu0 0.0
    %143 = vmatpush1.msra.mxu0 0.0
    %144 = vmatprep.subr.mxu0 0.0
    %145 = vmatpush1.msra.mxu0 0.0
    %146 = vmatprep.subr.mxu0 0.0
    %147 = vmatpush1.msra.mxu0 0.0
    %148 = vmatprep.subr.mxu0 0.0
    %149 = vmatpush1.msra.mxu0 0.0
    %150 = vmatprep.subr.mxu0 0.0
    %151 = vmatpush1.msra.mxu0 0.0
    %152 = vmatprep.subr.mxu0 0.0
    %153 = vmatpush1.msra.mxu0 0.0
    %154 = vmatprep.subr.mxu0 0.0
    %155 = vmatpush1.msra.mxu0 0.0
    %156 = vmatprep.subr.mxu0 0.0
    %157 = vmatpush1.msra.mxu0 0.0
    %158 = vmatprep.subr.mxu0 0.0
    %159 = vmatpush1.msra.mxu0 0.0
    %160 = vmatprep.subr.mxu0 0.0
    %161 = vmatpush1.msra.mxu0 0.0
    %162 = vmatprep.subr.mxu0 0.0
    %163 = vmatpush1.msra.mxu0 0.0
    %164 = vmatprep.subr.mxu0 0.0
    %165 = vmatpush1.msra.mxu0 0.0
    %166 = vmatprep.subr.mxu0 0.0
    %167 = vmatpush1.msra.mxu0 0.0
    %168 = vmatprep.subr.mxu0 0.0
    %169 = vmatpush1.msra.mxu0 0.0
    %170 = vmatprep.subr.mxu0 0.0
    %171 = vmatpush1.msra.mxu0 0.0
    %172 = vmatprep.subr.mxu0 0.0
    %173 = vmatpush1.msra.mxu0 0.0
    %174 = vmatprep.subr.mxu0 0.0
    %175 = vmatpush1.msra.mxu0 0.0
    %176 = vmatprep.subr.mxu0 0.0
    %177 = vmatpush1.msra.mxu0 0.0
    %178 = vmatprep.subr.mxu0 0.0
    %179 = vmatpush1.msra.mxu0 0.0
    %180 = vmatprep.subr.mxu0 0.0
    %181 = vmatpush1.msra.mxu0 0.0
    %182 = vmatprep.subr.mxu0 0.0
    %183 = vmatpush1.msra.mxu0 0.0
    %184 = vmatprep.subr.mxu0 0.0
    %185 = vmatpush1.msra.mxu0 0.0
    %186 = vmatprep.subr.mxu0 0.0
    %187 = vmatpush1.msra.mxu0 0.0
    %188 = vmatprep.subr.mxu0 0.0
    %189 = vmatpush1.msra.mxu0 0.0
    %190 = vmatprep.subr.mxu0 0.0
    %191 = vmatpush1.msra.mxu0 0.0
    %192 = vmatprep.subr.mxu0 0.0
    %193 = vmatpush1.msra.mxu0 0.0
    %194 = vmatprep.subr.mxu0 0.0
    %195 = vmatpush1.msra.mxu0 0.0
    %196 = vmatprep.mubr.f32.mxu0 0.0
    %v197 = vand.u32 %v31, 4294901760
    %198 = vmatmul.mubr.f32.gmra.mrb[0].mxu0 %v197
    %v199 = vpop.f32.mrb[0].mxu0
    %v200 = vadd.f32 %v109, %v199
    %v201 = vpop.f32.mrb[0].mxu0
    %202 = vdwg.mxu0
    %203 = vmatprep.subr.mxu0 0.0
    %v204 = vand.u32 %v19, 4294901760
    %v205 = vsub.f32 %v19, %v204
    %206 = vmatpush1.msra.mxu0 %v205
    %207 = vmatprep.subr.mxu0 0.0
    %v208 = vand.u32 %v20, 4294901760
    %v209 = vsub.f32 %v20, %v208
    %210 = vmatpush1.msra.mxu0 %v209
    %211 = vmatprep.subr.mxu0 0.0
    %v212 = vand.u32 %v21, 4294901760
    %v213 = vsub.f32 %v21, %v212
    %214 = vmatpush1.msra.mxu0 %v213
    %215 = vmatprep.subr.mxu0 0.0
    %v216 = vand.u32 %v22, 4294901760
    %v217 = vsub.f32 %v22, %v216
    %218 = vmatpush1.msra.mxu0 %v217
    %219 = vmatprep.subr.mxu0 0.0
    %220 = vmatpush1.msra.mxu0 0.0
    %221 = vmatprep.subr.mxu0 0.0
    %222 = vmatpush1.msra.mxu0 0.0
    %223 = vmatprep.subr.mxu0 0.0
    %224 = vmatpush1.msra.mxu0 0.0
    %225 = vmatprep.subr.mxu0 0.0
    %226 = vmatpush1.msra.mxu0 0.0
    %227 = vmatprep.subr.mxu0 0.0
    %228 = vmatpush1.msra.mxu0 0.0
    %229 = vmatprep.subr.mxu0 0.0
    %230 = vmatpush1.msra.mxu0 0.0
    %231 = vmatprep.subr.mxu0 0.0
    %232 = vmatpush1.msra.mxu0 0.0
    %233 = vmatprep.subr.mxu0 0.0
    %234 = vmatpush1.msra.mxu0 0.0
    %235 = vmatprep.subr.mxu0 0.0
    %236 = vmatpush1.msra.mxu0 0.0
    %237 = vmatprep.subr.mxu0 0.0
    %238 = vmatpush1.msra.mxu0 0.0
    %239 = vmatprep.subr.mxu0 0.0
    %240 = vmatpush1.msra.mxu0 0.0
    %241 = vmatprep.subr.mxu0 0.0
    %242 = vmatpush1.msra.mxu0 0.0
    %243 = vmatprep.subr.mxu0 0.0
    %244 = vmatpush1.msra.mxu0 0.0
    %245 = vmatprep.subr.mxu0 0.0
    %246 = vmatpush1.msra.mxu0 0.0
    %247 = vmatprep.subr.mxu0 0.0
    %248 = vmatpush1.msra.mxu0 0.0
    %249 = vmatprep.subr.mxu0 0.0
    %250 = vmatpush1.msra.mxu0 0.0
    %251 = vmatprep.subr.mxu0 0.0
    %252 = vmatpush1.msra.mxu0 0.0
    %253 = vmatprep.subr.mxu0 0.0
    %254 = vmatpush1.msra.mxu0 0.0
    %255 = vmatprep.subr.mxu0 0.0
    %256 = vmatpush1.msra.mxu0 0.0
    %257 = vmatprep.subr.mxu0 0.0
    %258 = vmatpush1.msra.mxu0 0.0
    %259 = vmatprep.subr.mxu0 0.0
    %260 = vmatpush1.msra.mxu0 0.0
    %261 = vmatprep.subr.mxu0 0.0
    %262 = vmatpush1.msra.mxu0 0.0
    %263 = vmatprep.subr.mxu0 0.0
    %264 = vmatpush1.msra.mxu0 0.0
    %265 = vmatprep.subr.mxu0 0.0
    %266 = vmatpush1.msra.mxu0 0.0
    %267 = vmatprep.subr.mxu0 0.0
    %268 = vmatpush1.msra.mxu0 0.0
    %269 = vmatprep.subr.mxu0 0.0
    %270 = vmatpush1.msra.mxu0 0.0
    %271 = vmatprep.subr.mxu0 0.0
    %272 = vmatpush1.msra.mxu0 0.0
    %273 = vmatprep.subr.mxu0 0.0
    %274 = vmatpush1.msra.mxu0 0.0
    %275 = vmatprep.mubr.f32.mxu0 0.0
    %v276 = vand.u32 %v31, 4294901760
    %v277 = vsub.f32 %v31, %v276
    %278 = vmatmul.mubr.f32.gmra.mrb[0].mxu0 %v277
    %v279 = vpop.f32.mrb[0].mxu0
    %v280 = vadd.f32 %v200, %v279
    %v281 = vpop.f32.mrb[0].mxu0
    %282 = vdwg.mxu0
    %283 = vmatprep.subr.mxu0 0.0
    %v284 = vand.u32 %v19, 4294901760
    %285 = vmatpush1.msra.mxu0 %v284
    %286 = vmatprep.subr.mxu0 0.0
    %v287 = vand.u32 %v20, 4294901760
    %288 = vmatpush1.msra.mxu0 %v287
    %289 = vmatprep.subr.mxu0 0.0
    %v290 = vand.u32 %v21, 4294901760
    %291 = vmatpush1.msra.mxu0 %v290
    %292 = vmatprep.subr.mxu0 0.0
    %v293 = vand.u32 %v22, 4294901760
    %294 = vmatpush1.msra.mxu0 %v293
    %295 = vmatprep.subr.mxu0 0.0
    %296 = vmatpush1.msra.mxu0 0.0
    %297 = vmatprep.subr.mxu0 0.0
    %298 = vmatpush1.msra.mxu0 0.0
    %299 = vmatprep.subr.mxu0 0.0
    %300 = vmatpush1.msra.mxu0 0.0
    %301 = vmatprep.subr.mxu0 0.0
    %302 = vmatpush1.msra.mxu0 0.0
    %303 = vmatprep.subr.mxu0 0.0
    %304 = vmatpush1.msra.mxu0 0.0
    %305 = vmatprep.subr.mxu0 0.0
    %306 = vmatpush1.msra.mxu0 0.0
    %307 = vmatprep.subr.mxu0 0.0
    %308 = vmatpush1.msra.mxu0 0.0
    %309 = vmatprep.subr.mxu0 0.0
    %310 = vmatpush1.msra.mxu0 0.0
    %311 = vmatprep.subr.mxu0 0.0
    %312 = vmatpush1.msra.mxu0 0.0
    %313 = vmatprep.subr.mxu0 0.0
    %314 = vmatpush1.msra.mxu0 0.0
    %315 = vmatprep.subr.mxu0 0.0
    %316 = vmatpush1.msra.mxu0 0.0
    %317 = vmatprep.subr.mxu0 0.0
    %318 = vmatpush1.msra.mxu0 0.0
    %319 = vmatprep.subr.mxu0 0.0
    %320 = vmatpush1.msra.mxu0 0.0
    %321 = vmatprep.subr.mxu0 0.0
    %322 = vmatpush1.msra.mxu0 0.0
    %323 = vmatprep.subr.mxu0 0.0
    %324 = vmatpush1.msra.mxu0 0.0
    %325 = vmatprep.subr.mxu0 0.0
    %326 = vmatpush1.msra.mxu0 0.0
    %327 = vmatprep.subr.mxu0 0.0
    %328 = vmatpush1.msra.mxu0 0.0
    %329 = vmatprep.subr.mxu0 0.0
    %330 = vmatpush1.msra.mxu0 0.0
    %331 = vmatprep.subr.mxu0 0.0
    %332 = vmatpush1.msra.mxu0 0.0
    %333 = vmatprep.subr.mxu0 0.0
    %334 = vmatpush1.msra.mxu0 0.0
    %335 = vmatprep.subr.mxu0 0.0
    %336 = vmatpush1.msra.mxu0 0.0
    %337 = vmatprep.subr.mxu0 0.0
    %338 = vmatpush1.msra.mxu0 0.0
    %339 = vmatprep.subr.mxu0 0.0
    %340 = vmatpush1.msra.mxu0 0.0
    %341 = vmatprep.subr.mxu0 0.0
    %342 = vmatpush1.msra.mxu0 0.0
    %343 = vmatprep.subr.mxu0 0.0
    %344 = vmatpush1.msra.mxu0 0.0
    %345 = vmatprep.subr.mxu0 0.0
    %346 = vmatpush1.msra.mxu0 0.0
    %347 = vmatprep.subr.mxu0 0.0
    %348 = vmatpush1.msra.mxu0 0.0
    %349 = vmatprep.subr.mxu0 0.0
    %350 = vmatpush1.msra.mxu0 0.0
    %351 = vmatprep.mubr.f32.mxu0 0.0
    %v352 = vand.u32 %v31, 4294901760
    %v353 = vsub.f32 %v31, %v352
    %v354 = vand.u32 %v353, 4294901760
    %355 = vmatmul.mubr.f32.gmra.mrb[0].mxu0 %v354
    %v356 = vpop.f32.mrb[0].mxu0
    %v357 = vadd.f32 %v280, %v356
    %v358 = vpop.f32.mrb[0].mxu0
    %359 = vdwg.mxu0
    %360 = vmatprep.subr.mxu0 0.0
    %v361 = vand.u32 %v19, 4294901760
    %v362 = vsub.f32 %v19, %v361
    %v363 = vand.u32 %v362, 4294901760
    %364 = vmatpush1.msra.mxu0 %v363
    %365 = vmatprep.subr.mxu0 0.0
    %v366 = vand.u32 %v20, 4294901760
    %v367 = vsub.f32 %v20, %v366
    %v368 = vand.u32 %v367, 4294901760
    %369 = vmatpush1.msra.mxu0 %v368
    %370 = vmatprep.subr.mxu0 0.0
    %v371 = vand.u32 %v21, 4294901760
    %v372 = vsub.f32 %v21, %v371
    %v373 = vand.u32 %v372, 4294901760
    %374 = vmatpush1.msra.mxu0 %v373
    %375 = vmatprep.subr.mxu0 0.0
    %v376 = vand.u32 %v22, 4294901760
    %v377 = vsub.f32 %v22, %v376
    %v378 = vand.u32 %v377, 4294901760
    %379 = vmatpush1.msra.mxu0 %v378
    %380 = vmatprep.subr.mxu0 0.0
    %381 = vmatpush1.msra.mxu0 0.0
    %382 = vmatprep.subr.mxu0 0.0
    %383 = vmatpush1.msra.mxu0 0.0
    %384 = vmatprep.subr.mxu0 0.0
    %385 = vmatpush1.msra.mxu0 0.0
    %386 = vmatprep.subr.mxu0 0.0
    %387 = vmatpush1.msra.mxu0 0.0
    %388 = vmatprep.subr.mxu0 0.0
    %389 = vmatpush1.msra.mxu0 0.0
    %390 = vmatprep.subr.mxu0 0.0
    %391 = vmatpush1.msra.mxu0 0.0
    %392 = vmatprep.subr.mxu0 0.0
    %393 = vmatpush1.msra.mxu0 0.0
    %394 = vmatprep.subr.mxu0 0.0
    %395 = vmatpush1.msra.mxu0 0.0
    %396 = vmatprep.subr.mxu0 0.0
    %397 = vmatpush1.msra.mxu0 0.0
    %398 = vmatprep.subr.mxu0 0.0
    %399 = vmatpush1.msra.mxu0 0.0
    %400 = vmatprep.subr.mxu0 0.0
    %401 = vmatpush1.msra.mxu0 0.0
    %402 = vmatprep.subr.mxu0 0.0
    %403 = vmatpush1.msra.mxu0 0.0
    %404 = vmatprep.subr.mxu0 0.0
    %405 = vmatpush1.msra.mxu0 0.0
    %406 = vmatprep.subr.mxu0 0.0
    %407 = vmatpush1.msra.mxu0 0.0
    %408 = vmatprep.subr.mxu0 0.0
    %409 = vmatpush1.msra.mxu0 0.0
    %410 = vmatprep.subr.mxu0 0.0
    %411 = vmatpush1.msra.mxu0 0.0
    %412 = vmatprep.subr.mxu0 0.0
    %413 = vmatpush1.msra.mxu0 0.0
    %414 = vmatprep.subr.mxu0 0.0
    %415 = vmatpush1.msra.mxu0 0.0
    %416 = vmatprep.subr.mxu0 0.0
    %417 = vmatpush1.msra.mxu0 0.0
    %418 = vmatprep.subr.mxu0 0.0
    %419 = vmatpush1.msra.mxu0 0.0
    %420 = vmatprep.subr.mxu0 0.0
    %421 = vmatpush1.msra.mxu0 0.0
    %422 = vmatprep.subr.mxu0 0.0
    %423 = vmatpush1.msra.mxu0 0.0
    %424 = vmatprep.subr.mxu0 0.0
    %425 = vmatpush1.msra.mxu0 0.0
    %426 = vmatprep.subr.mxu0 0.0
    %427 = vmatpush1.msra.mxu0 0.0
    %428 = vmatprep.subr.mxu0 0.0
    %429 = vmatpush1.msra.mxu0 0.0
    %430 = vmatprep.subr.mxu0 0.0
    %431 = vmatpush1.msra.mxu0 0.0
    %432 = vmatprep.subr.mxu0 0.0
    %433 = vmatpush1.msra.mxu0 0.0
    %434 = vmatprep.subr.mxu0 0.0
    %435 = vmatpush1.msra.mxu0 0.0
    %436 = vmatprep.mubr.f32.mxu0 0.0
    %v437 = vand.u32 %v31, 4294901760
    %438 = vmatmul.mubr.f32.gmra.mrb[0].mxu0 %v437
    %v439 = vpop.f32.mrb[0].mxu0
    %v440 = vadd.f32 %v357, %v439
    %v441 = vpop.f32.mrb[0].mxu0
    %442 = vdwg.mxu0
    %443 = vmatprep.subr.mxu0 0.0
    %v444 = vand.u32 %v19, 4294901760
    %445 = vmatpush1.msra.mxu0 %v444
    %446 = vmatprep.subr.mxu0 0.0
    %v447 = vand.u32 %v20, 4294901760
    %448 = vmatpush1.msra.mxu0 %v447
    %449 = vmatprep.subr.mxu0 0.0
    %v450 = vand.u32 %v21, 4294901760
    %451 = vmatpush1.msra.mxu0 %v450
    %452 = vmatprep.subr.mxu0 0.0
    %v453 = vand.u32 %v22, 4294901760
    %454 = vmatpush1.msra.mxu0 %v453
    %455 = vmatprep.subr.mxu0 0.0
    %456 = vmatpush1.msra.mxu0 0.0
    %457 = vmatprep.subr.mxu0 0.0
    %458 = vmatpush1.msra.mxu0 0.0
    %459 = vmatprep.subr.mxu0 0.0
    %460 = vmatpush1.msra.mxu0 0.0
    %461 = vmatprep.subr.mxu0 0.0
    %462 = vmatpush1.msra.mxu0 0.0
    %463 = vmatprep.subr.mxu0 0.0
    %464 = vmatpush1.msra.mxu0 0.0
    %465 = vmatprep.subr.mxu0 0.0
    %466 = vmatpush1.msra.mxu0 0.0
    %467 = vmatprep.subr.mxu0 0.0
    %468 = vmatpush1.msra.mxu0 0.0
    %469 = vmatprep.subr.mxu0 0.0
    %470 = vmatpush1.msra.mxu0 0.0
    %471 = vmatprep.subr.mxu0 0.0
    %472 = vmatpush1.msra.mxu0 0.0
    %473 = vmatprep.subr.mxu0 0.0
    %474 = vmatpush1.msra.mxu0 0.0
    %475 = vmatprep.subr.mxu0 0.0
    %476 = vmatpush1.msra.mxu0 0.0
    %477 = vmatprep.subr.mxu0 0.0
    %478 = vmatpush1.msra.mxu0 0.0
    %479 = vmatprep.subr.mxu0 0.0
    %480 = vmatpush1.msra.mxu0 0.0
    %481 = vmatprep.subr.mxu0 0.0
    %482 = vmatpush1.msra.mxu0 0.0
    %483 = vmatprep.subr.mxu0 0.0
    %484 = vmatpush1.msra.mxu0 0.0
    %485 = vmatprep.subr.mxu0 0.0
    %486 = vmatpush1.msra.mxu0 0.0
    %487 = vmatprep.subr.mxu0 0.0
    %488 = vmatpush1.msra.mxu0 0.0
    %489 = vmatprep.subr.mxu0 0.0
    %490 = vmatpush1.msra.mxu0 0.0
    %491 = vmatprep.subr.mxu0 0.0
    %492 = vmatpush1.msra.mxu0 0.0
    %493 = vmatprep.subr.mxu0 0.0
    %494 = vmatpush1.msra.mxu0 0.0
    %495 = vmatprep.subr.mxu0 0.0
    %496 = vmatpush1.msra.mxu0 0.0
    %497 = vmatprep.subr.mxu0 0.0
    %498 = vmatpush1.msra.mxu0 0.0
    %499 = vmatprep.subr.mxu0 0.0
    %500 = vmatpush1.msra.mxu0 0.0
    %501 = vmatprep.subr.mxu0 0.0
    %502 = vmatpush1.msra.mxu0 0.0
    %503 = vmatprep.subr.mxu0 0.0
    %504 = vmatpush1.msra.mxu0 0.0
    %505 = vmatprep.subr.mxu0 0.0
    %506 = vmatpush1.msra.mxu0 0.0
    %507 = vmatprep.subr.mxu0 0.0
    %508 = vmatpush1.msra.mxu0 0.0
    %509 = vmatprep.subr.mxu0 0.0
    %510 = vmatpush1.msra.mxu0 0.0
    %511 = vmatprep.mubr.f32.mxu0 0.0
    %v512 = vand.u32 %v31, 4294901760
    %513 = vmatmul.mubr.f32.gmra.mrb[0].mxu0 %v512
    %v514 = vpop.f32.mrb[0].mxu0
    %v515 = vadd.f32 %v440, %v514
    %v516 = vpop.f32.mrb[0].mxu0
    %517 = vdwg.mxu0
    %v518 = vld [vmem:[%s3] sm:$0xff]
    %v519 = vld [vmem:[%s3 + $0x8] sm:$0xff]
    %521 = vset.pattern.permute.xlu0 0
    %522 = vperm.xlu0 %521, %v515
    %v523 = vpop.permute.xlu0 %522
    %v525 = vadd.f32 %v518, %v523
    %v526 = vadd.f32 %v519, %v523
    %527 = vst [vmem:[#allocation2] sm:$0xff] %v525
    %528 = vst [vmem:[#allocation2 + $0x8] sm:$0xff] %v526
    %s529 = scalar_lea.vmem %s3, 16
    %v530 = vld [vmem:[%s529] sm:$0xff]
    %v531 = vld [vmem:[%s529 + $0x8] sm:$0xff]
    %532 = vset.pattern.permute.xlu0 1
    %533 = vperm.xlu0 %532, %v515
    %v534 = vpop.permute.xlu0 %533
    %v536 = vadd.f32 %v530, %v534
    %v537 = vadd.f32 %v531, %v534
    %s538 = scalar_lea.vmem [#allocation2], 16
    %539 = vst [vmem:[%s538] sm:$0xff] %v536
    %540 = vst [vmem:[%s538 + $0x8] sm:$0xff] %v537
    // Predicated region
    $region18: #{tpu_custom_call.1} parent=1 // pred_check
      _
    $region19: #{tpu_custom_call.1} parent=1 // pred_check_branch
      %542 = sbr.rel (0) target = $region21
    $region20: #{tpu_custom_call.1} parent=1 // pred_region
      %s544 = ssub.s32 512, 512
      %545 = vsyncadd [#allocation3], %s544
      %s546 = sshll.u32 [#allocation2], 4
      %s547 = int_to_ptr.vmem [resolvable:$true] %s546
      %552 = dma.vmem_to_hbm [thread:$0]  %s547, 512, %s4, [#allocation3], 256, 256, 16
    $region21: #{tpu_custom_call.1} parent=1 // pred_fallthru
      _
    // Predicated region
    $region22: #{tpu_custom_call.1} parent=1 // pred_check
      _
    $region23: #{tpu_custom_call.1} parent=1 // pred_check_branch
      %554 = sbr.rel (0) target = $region25
    $region24: #{tpu_custom_call.1} parent=1 // pred_region
      %555 = dma.done [#allocation3], 512
    $region25: #{tpu_custom_call.1} parent=1 // pred_fallthru
      _
    %556 = vsyncpa [#allocation3], 1

</llo_original>
